<compile_context>
chip_gen: v7x
topology: tpu7x:2x2x1
jax: 0.10.0
libtpu: 0.0.40
codegen_flags: <defaults>
</compile_context>

<pallas_src>
import jax
import jax.numpy as jnp
from jax.experimental import pallas as pl
from jax.experimental.pallas import tpu as pltpu


def _identity_kernel(x_ref, o_ref):
    # Whole-tile load/store; the BlockSpec pipeline performs the HBM<->VMEM DMAs.
    o_ref[...] = x_ref[...]


_TARGET_BLOCK_BYTES = 4 * 1024 * 1024                      # ~4 MiB per block
# Lane-dense widths (multiples of 128).  Wider is better: fewer grid steps and
# unmasked full-width stores.  Checked widest-first.
_LANE_CANDIDATES = (8192, 4096, 2048, 1024, 512, 256, 128)


def _choose_2d_view(shape):
    """Pick a (rows, lanes) factorization with a lane-dense last dim when possible."""
    total = 1
    for d in shape:
        total *= d

    best = None
    for lanes in _LANE_CANDIDATES:
        if total % lanes == 0:
            rows = total // lanes
            if rows >= 8:            # prefer >=8 sublane rows so tiles are well formed
                return rows, lanes
            if best is None:
                best = (rows, lanes)  # remember widest divisor even if rows < 8
    if best is not None:
        return best

    # Fallback (total not divisible by 128): keep the original last dim as lanes.
    # A full-array lane dim is legal even if <128; stores may be masked but this
    # path only triggers for small / oddly shaped tensors.
    if len(shape) >= 2:
        lanes = shape[-1]
        rows = total // lanes
    else:
        rows, lanes = 1, max(total, 1)
    return max(rows, 1), max(lanes, 1)


def encoder_forward(x: jax.Array) -> jax.Array:
    """Identity forward pass (Encoder.forward: return x) via an aliased Pallas copy.

    Preserves shape, dtype, and values exactly for any input rank.
    """
    if x.size == 0:
        return x

    orig_shape = x.shape
    rows, lanes = _choose_2d_view(x.shape)
    x2 = x.reshape(rows, lanes)
    itemsize = x2.dtype.itemsize

    # Row tile sized for ~_TARGET_BLOCK_BYTES, a multiple of 8 sublanes.
    cap_rows = max(8, (_TARGET_BLOCK_BYTES // (lanes * itemsize)) // 8 * 8)
    block_rows = rows if rows <= cap_rows else cap_rows
    grid = (pl.cdiv(rows, block_rows),)

    out2 = pl.pallas_call(
        _identity_kernel,
        out_shape=jax.ShapeDtypeStruct((rows, lanes), x2.dtype),
        grid_spec=pltpu.PrefetchScalarGridSpec(
            num_scalar_prefetch=0,
            grid=grid,
            in_specs=[pl.BlockSpec((block_rows, lanes), lambda i: (i, 0))],
            out_specs=pl.BlockSpec((block_rows, lanes), lambda i: (i, 0)),
        ),
        # Alias input 0 -> output 0: lets XLA elide the HBM round-trip when the
        # input buffer is donatable; the in-kernel copy keeps semantics exact
        # either way.
        input_output_aliases={0: 0},
        cost_estimate=pl.CostEstimate(
            flops=0,
            transcendentals=0,
            bytes_accessed=2 * rows * lanes * itemsize,
        ),
        compiler_params=pltpu.CompilerParams(
            dimension_semantics=("parallel",),
            # Raise scoped VMEM (v5e default is only 16 MiB); 32 MiB is safe on
            # every generation incl. v7x (64 MiB physical).
            vmem_limit_bytes=32 * 1024 * 1024,
        ),
    )(x2)

    return out2.reshape(orig_shape)


if __name__ == "__main__":
    key = jax.random.PRNGKey(0)
    # Small NCHW input consistent with a conv-autoencoder encoder input.
    x = jax.random.normal(key, (2, 4, 16, 16), dtype=jnp.float32)

    y = encoder_forward(x)
    y = jax.block_until_ready(y)

    assert y.shape == x.shape
    assert y.dtype == x.dtype
    assert bool(jnp.array_equal(y, x))

    print("KERNEL_OK")
</pallas_src>

<mosaic_0001>
module attributes {stable_mosaic.version = 11 : i64} {
  func.func @_identity_kernel(%arg0: i32, %arg1: memref<8x256xf32, #tpu.memory_space<vmem>>, %arg2: memref<8x256xf32, #tpu.memory_space<vmem>>) attributes {dimension_semantics = [#tpu.dimension_semantics<parallel>], iteration_bounds = array<i64: 1>, scalar_prefetch = 0 : i64, scratch_operands = 0 : i64, tpu.core_type = #tpu.core_type<tc>, window_params = [{transform_indices = @transform_0, window_bounds = array<i64: 8, 256>}, {transform_indices = @transform_1, window_bounds = array<i64: 8, 256>}]} {
    %c0 = arith.constant 0 : index
    %c0_0 = arith.constant 0 : index
    %0 = vector.load %arg1[%c0, %c0_0] : memref<8x256xf32, #tpu.memory_space<vmem>>, vector<8x256xf32>
    %c0_1 = arith.constant 0 : index
    %c0_2 = arith.constant 0 : index
    %1 = vector.load %arg2[%c0_1, %c0_2] : memref<8x256xf32, #tpu.memory_space<vmem>>, vector<8x256xf32>
    tpu.vector_store %arg2[%c0_1, %c0_2], %0 {strides = array<i32>} : memref<8x256xf32, #tpu.memory_space<vmem>>, vector<8x256xf32>,
    return
  }
  func.func @transform_0(%arg0: i32) -> (i32, i32) {
    %c0_i32 = arith.constant 0 : i32
    %c0_i32_0 = arith.constant 0 : i32
    return %arg0, %c0_i32 : i32, i32
  }
  func.func @transform_1(%arg0: i32) -> (i32, i32) {
    %c0_i32 = arith.constant 0 : i32
    %c0_i32_0 = arith.constant 0 : i32
    return %arg0, %c0_i32 : i32, i32
  }
}

</mosaic_0001>

<llo_original>
// kernel: tpu_custom_call.1
$region0: #{tpu_custom_call.1}
  #allocation0 [shape = 'u32[]', space=smem, size = 0x4, offset = 0x4, fixed_abs, tag = 'smem constant byte address 0x4 - core index']
  #allocation1 [shape = 'u32[144,128]{1,0:T(1,128)}', space=vmem, size = 0x12000, scoped, tag = 'internal scratch']
  %s0 = inlined_call_operand.hbm [shape: f32[8,256], index: 0, kind: input, shape index: {}, may-alias: {0,1}]
  %s1 = inlined_call_operand.hbm [shape: f32[8,256], index: 1, kind: output, shape index: {}, may-alias: {0,1}]
  %s2 = sld [smem:[#allocation0]]
  $region18: #{tpu_custom_call.1} parent=0
    _
  %s4 = ssub.s32 1, %s2
  %s5 = scalar_select 0, %s4, %s2
  $region1: #{tpu_custom_call.1} parent=0
    #allocation2 [shape = 'u8[8192]{0}', space=vmem, size = 0x2000, scoped, tag = 'input window, operand 0, single buffered']
    #allocation3 [shape = 's32[1]{0}', space=sflag, size = 0x4, scoped, tag = 'scoped memory for tpu_custom_call.1']
    #allocation4 [shape = 's32[1]{0}', space=sflag, size = 0x4, scoped, tag = 'scoped memory for tpu_custom_call.1']
    #allocation5 [shape = 'u8[8192]{0}', space=vmem, size = 0x2000, scoped, tag = 'output window, operand 0, single buffered']
    %6 = vsyncpa [#allocation3], 0
    %7 = vsyncpa [#allocation4], 0
    // Predicated region
    $region2: #{tpu_custom_call.1} parent=1 // pred_check
      _
    $region3: #{tpu_custom_call.1} parent=1 // pred_check_branch
      %9 = sbr.rel (0) target = $region5
    $region4: #{tpu_custom_call.1} parent=1 // pred_region
      %s11 = ssub.s32 256, 256
      %12 = vsyncadd [#allocation3], %s11
      %s14 = sshll.u32 [#allocation2], 4
      %s15 = int_to_ptr.vmem [resolvable:$true] %s14
      %17 = dma.hbm_to_vmem [thread:$0]  %s0, 256, %s15, [#allocation3]
    $region5: #{tpu_custom_call.1} parent=1 // pred_fallthru
      _
    // Predicated region
    $region6: #{tpu_custom_call.1} parent=1 // pred_check
      _
    $region7: #{tpu_custom_call.1} parent=1 // pred_check_branch
      %19 = sbr.rel (0) target = $region9
    $region8: #{tpu_custom_call.1} parent=1 // pred_region
      %20 = dma.done [#allocation3], 256
    $region9: #{tpu_custom_call.1} parent=1 // pred_fallthru
      _
    %v21 = vld [vmem:[#allocation2] sm:$0xff]
    %v22 = vld [vmem:[#allocation2 + $0x8] sm:$0xff]
    %23 = vst [vmem:[#allocation5] sm:$0xff] %v21
    %24 = vst [vmem:[#allocation5 + $0x8] sm:$0xff] %v22
    // Predicated region
    $region10: #{tpu_custom_call.1} parent=1 // pred_check
      _
    $region11: #{tpu_custom_call.1} parent=1 // pred_check_branch
      %26 = sbr.rel (0) target = $region13
    $region12: #{tpu_custom_call.1} parent=1 // pred_region
      %s28 = ssub.s32 256, 256
      %29 = vsyncadd [#allocation4], %s28
      %s31 = sshll.u32 [#allocation5], 4
      %s32 = int_to_ptr.vmem [resolvable:$true] %s31
      %34 = dma.vmem_to_hbm [thread:$0]  %s32, 256, %s1, [#allocation4]
    $region13: #{tpu_custom_call.1} parent=1 // pred_fallthru
      _
    // Predicated region
    $region14: #{tpu_custom_call.1} parent=1 // pred_check
      _
    $region15: #{tpu_custom_call.1} parent=1 // pred_check_branch
      %36 = sbr.rel (0) target = $region17
    $region16: #{tpu_custom_call.1} parent=1 // pred_region
      %37 = dma.done [#allocation4], 256
    $region17: #{tpu_custom_call.1} parent=1 // pred_fallthru
      _
    %38 = vsyncpa [#allocation3], 1
    %39 = vsyncpa [#allocation4], 1

</llo_original>
